<compile_context>
chip_gen: v7x
topology: tpu7x:2x2x1
jax: 0.10.0
libtpu: 0.0.40
codegen_flags: <defaults>
</compile_context>

<pallas_src>
import functools
import math

import jax
import jax.numpy as jnp
import numpy as np
from jax import lax
from jax.experimental import pallas as pl
from jax.experimental.pallas import tpu as pltpu


# ----------------------------- small Pallas kernel --------------------------

def _linear_kernel(x_ref, w_ref, b_ref, o_ref):
    o_ref[...] = (jnp.dot(x_ref[...], w_ref[...],
                          preferred_element_type=jnp.float32) + b_ref[...])


def pallas_linear(x, w, b):
    """x: [M, Din] @ w: [Din, Dout] + b: [1, Dout] -> [M, Dout] (prior net)."""
    M, Din = x.shape
    Dout = w.shape[1]
    return pl.pallas_call(
        _linear_kernel,
        out_shape=jax.ShapeDtypeStruct((M, Dout), jnp.float32),
        grid=(1,),
        in_specs=[pl.BlockSpec((M, Din), lambda i: (0, 0)),
                  pl.BlockSpec((Din, Dout), lambda i: (0, 0)),
                  pl.BlockSpec((1, Dout), lambda i: (0, 0))],
        out_specs=pl.BlockSpec((M, Dout), lambda i: (0, 0)),
    )(x, w, b)


# ----------------------- fused per-step decoder kernel -----------------------

def _layer_norm(v, g, b):
    mu = jnp.mean(v, axis=-1, keepdims=True)
    c = v - mu
    var = jnp.mean(c * c, axis=-1, keepdims=True)
    return c * lax.rsqrt(var + 1e-5) * g + b


def _fused_decoder_kernel(x_in_ref, pos_ref, t_row_ref, t_col_ref,
                          ag_row_ref, ag_col_ref, obs_row_ref, mem_ref,
                          w_in_ref, b_in_ref,
                          wqkv_sa_ref, bqkv_sa_ref, wo_sa_ref, bo_sa_ref,
                          wq_ca_ref, bq_ca_ref, wkv_ca_ref, bkv_ca_ref,
                          wo_ca_ref, bo_ca_ref,
                          w1_ref, b1_ref, w2_ref, b2_ref,
                          lng_ref, lnb_ref,
                          w_head_ref, b_head_ref, orig_ref,
                          o_ref, *, n_head, n_layer):
    D = w_in_ref.shape[1]
    hd = D // n_head
    scale = 1.0 / math.sqrt(hd)
    NEG = jnp.float32(-1e30)
    bf16 = jnp.bfloat16

    # Masks rebuilt in-kernel from 1-D vectors, ONCE per batch grid step (they
    # are reused by all layers).  Padded positions carry timestep=+1e9 (masked
    # out as keys, but never produce an all-masked query row -> no NaN) and
    # agent_id=-1e9 (matches nothing).  The all-zero memory mask is dropped.
    t_row = t_row_ref[...]                                 # [1, L]
    t_col = t_col_ref[...]                                 # [L, 1]
    causal_add = jnp.where(t_col < t_row, NEG, 0.0)        # [L, L]
    so_tt = ag_col_ref[...] == ag_row_ref[...]             # [L, L]
    so_tm = ag_col_ref[...] == obs_row_ref[...]            # [L, S]

    mem_bf = mem_ref[0].astype(bf16)                       # [S, D]

    # ---- fused input_fc + positional encoding (dropout = identity) ----------
    x = (jnp.dot(x_in_ref[0].astype(bf16), w_in_ref[...],
                 preferred_element_type=jnp.float32)
         + b_in_ref[...] + pos_ref[...])                   # [L, D] f32

    def aa_attention(q_s, q_o, k_s, k_o, v, so_mask, add_mask, wo, bo):
        # Agent-aware attention.  Per-head contexts are concatenated into one
        # [L, D] slab and the output projection runs as a single K=D matmul.
        dn = (((1,), (1,)), ((), ()))
        ctx_heads = []
        for h in range(n_head):
            sl = slice(h * hd, (h + 1) * hd)
            s_self = lax.dot_general(q_s[:, sl], k_s[:, sl], dn,
                                     preferred_element_type=jnp.float32)
            s_other = lax.dot_general(q_o[:, sl], k_o[:, sl], dn,
                                      preferred_element_type=jnp.float32)
            scores = jnp.where(so_mask, s_self, s_other) * scale
            if add_mask is not None:
                scores = scores + add_mask
            scores = scores - jnp.max(scores, axis=-1, keepdims=True)
            p = jnp.exp(scores)
            p = p * pl.reciprocal(jnp.sum(p, axis=-1, keepdims=True),
                                  approx=True)
            ctx_heads.append(jnp.dot(p.astype(bf16), v[:, sl],
                                     preferred_element_type=jnp.float32))
        ctx = jnp.concatenate(ctx_heads, axis=-1).astype(bf16)   # [L, D]
        return jnp.dot(ctx, wo, preferred_element_type=jnp.float32) + bo

    # ---- n_layer agent-aware decoder layers (weights stay VMEM-resident) ----
    for l in range(n_layer):
        lng = lng_ref[l]                                   # [3, D]
        lnb = lnb_ref[l]

        # agent-aware self attention (fused 5-way QKV projection)
        x_bf = x.astype(bf16)
        qkv = (jnp.dot(x_bf, wqkv_sa_ref[l],
                       preferred_element_type=jnp.float32)
               + bqkv_sa_ref[l]).astype(bf16)              # [L, 5D] bf16 once
        sa = aa_attention(qkv[:, 0:D], qkv[:, D:2 * D], qkv[:, 2 * D:3 * D],
                          qkv[:, 3 * D:4 * D], qkv[:, 4 * D:5 * D],
                          so_tt, causal_add, wo_sa_ref[l], bo_sa_ref[l])
        x = _layer_norm(x + sa, lng[0:1], lnb[0:1])

        # agent-aware cross attention over encoder memory
        x_bf = x.astype(bf16)
        q2 = (jnp.dot(x_bf, wq_ca_ref[l],
                      preferred_element_type=jnp.float32)
              + bq_ca_ref[l]).astype(bf16)                 # [L, 2D]
        kv2 = (jnp.dot(mem_bf, wkv_ca_ref[l],
                       preferred_element_type=jnp.float32)
               + bkv_ca_ref[l]).astype(bf16)               # [S, 3D]
        ca = aa_attention(q2[:, 0:D], q2[:, D:2 * D],
                          kv2[:, 0:D], kv2[:, D:2 * D], kv2[:, 2 * D:3 * D],
                          so_tm, None, wo_ca_ref[l], bo_ca_ref[l])
        x = _layer_norm(x + ca, lng[1:2], lnb[1:2])

        # feed-forward
        x_bf = x.astype(bf16)
        h1 = jnp.maximum(jnp.dot(x_bf, w1_ref[l],
                                 preferred_element_type=jnp.float32)
                         + b1_ref[l], 0.0)
        ff = (jnp.dot(h1.astype(bf16), w2_ref[l],
                      preferred_element_type=jnp.float32) + b2_ref[l])
        x = _layer_norm(x + ff, lng[2:3], lnb[2:3])

    # ---- fused lane-padded output head + scene-norm origins ------------------
    o_ref[0] = (jnp.dot(x.astype(bf16), w_head_ref[...],
                        preferred_element_type=jnp.float32)
                + b_head_ref[...] + orig_ref[0])


def _build_fused_call(n_head, n_layer, B, L, S, D, F, in_dim, fd_pad):
    kern = functools.partial(_fused_decoder_kernel, n_head=n_head,
                             n_layer=n_layer)
    bidx = lambda b: (b, 0, 0)          # per-batch blocks
    z2 = lambda b: (0, 0)               # shared 2-D tensors (constant)
    z3 = lambda b: (0, 0, 0)            # stacked per-layer weights (constant)
    in_specs = [
        pl.BlockSpec((1, L, in_dim), bidx),          # dec input (padded)
        pl.BlockSpec((L, D), z2),                    # positional encodings
        pl.BlockSpec((1, L), z2),                    # timesteps (row)
        pl.BlockSpec((L, 1), z2),                    # timesteps (col)
        pl.BlockSpec((1, L), z2),                    # agent ids (row)
        pl.BlockSpec((L, 1), z2),                    # agent ids (col)
        pl.BlockSpec((1, S), z2),                    # obs identities
        pl.BlockSpec((1, S, D), bidx),               # encoder memory
        pl.BlockSpec((in_dim, D), z2),               # input_fc
        pl.BlockSpec((1, D), z2),
        pl.BlockSpec((n_layer, D, 5 * D), z3),       # self-attn fused qkv
        pl.BlockSpec((n_layer, 1, 5 * D), z3),
        pl.BlockSpec((n_layer, D, D), z3),           # self-attn out proj
        pl.BlockSpec((n_layer, 1, D), z3),
        pl.BlockSpec((n_layer, D, 2 * D), z3),       # cross-attn q
        pl.BlockSpec((n_layer, 1, 2 * D), z3),
        pl.BlockSpec((n_layer, D, 3 * D), z3),       # cross-attn kv
        pl.BlockSpec((n_layer, 1, 3 * D), z3),
        pl.BlockSpec((n_layer, D, D), z3),           # cross-attn out proj
        pl.BlockSpec((n_layer, 1, D), z3),
        pl.BlockSpec((n_layer, D, F), z3),           # FFN
        pl.BlockSpec((n_layer, 1, F), z3),
        pl.BlockSpec((n_layer, F, D), z3),
        pl.BlockSpec((n_layer, 1, D), z3),
        pl.BlockSpec((n_layer, 3, D), z3),           # LayerNorm gamma/beta
        pl.BlockSpec((n_layer, 3, D), z3),
        pl.BlockSpec((D, fd_pad), z2),               # lane-padded output head
        pl.BlockSpec((1, fd_pad), z2),
        pl.BlockSpec((1, L, fd_pad), bidx),          # scene-norm origins
    ]
    grid_spec = pltpu.PrefetchScalarGridSpec(
        num_scalar_prefetch=0,
        grid=(B,),
        in_specs=in_specs,
        out_specs=pl.BlockSpec((1, L, fd_pad), bidx),
    )
    # VMEM budget: resident weights (bf16) + biases/norms (f32) + per-batch
    # activations, ×2 headroom for double-buffered per-batch blocks.  Capped at
    # 60 MiB so it also fits v7x's 64 MiB VMEM.
    wbytes = 2 * (in_dim * D + D * fd_pad
                  + n_layer * (5 * D * D + D * D + 2 * D * D + 3 * D * D
                               + D * D + 2 * D * F))
    bbytes = 4 * (D + fd_pad + n_layer * (5 * D + D + 2 * D + 3 * D + D + F
                                          + D + 6 * D))
    abytes = 4 * (L * in_dim + L * D + 4 * L + S + S * D + 2 * L * fd_pad
                  + L * 5 * D + 2 * L * L + L * S)
    est = wbytes + bbytes + 2 * abytes
    vmem_limit = int(min(60 * 1024 * 1024, max(32 * 1024 * 1024, 2 * est)))
    return pl.pallas_call(
        kern,
        out_shape=jax.ShapeDtypeStruct((B, L, fd_pad), jnp.float32),
        grid_spec=grid_spec,
        compiler_params=pltpu.CompilerParams(
            dimension_semantics=("parallel",),
            vmem_limit_bytes=vmem_limit),
    )


# ------------------------------ Module wrapper -------------------------------

class FutureDecoderPallas:
    """JAX/Pallas implementation of FutureDecoder.forward (eval mode)."""

    FD_PAD = 128  # lane-dense padded output width for the forecast head

    def __init__(self, ctx, key):
        self.ar_detach = ctx['ar_detach']
        self.forecast_dim = ctx['forecast_dim']
        self.pred_type = ctx['pred_type']
        self.sn_out_type = ctx['sn_out_type']
        self.input_type = ctx['dec_input_type']
        self.future_frames = ctx['future_frames']
        self.nz = ctx['nz']
        self.z_type = ctx['z_type']
        self.model_dim = ctx['tf_model_dim']
        self.ff_dim = ctx['tf_ff_dim']
        self.n_head = ctx['tf_n_head']
        self.n_layer = ctx['future_decoder'].get('n_layer', 6)
        self.learn_prior = ctx['learn_prior']
        self.global_map_attention = ctx['global_map_attention']
        self.in_dim = (self.forecast_dim
                       + len(self.input_type) * self.forecast_dim + self.nz)
        D, F, nl = self.model_dim, self.ff_dim, self.n_layer
        assert self.FD_PAD >= self.forecast_dim

        keys = iter(jax.random.split(key, 64))

        def nrm(shape, scale=0.1, dtype=jnp.bfloat16):
            return (scale * jax.random.normal(next(keys), shape)).astype(dtype)

        # AgentFormerDecoder layer weights (class not provided; reconstructed as
        # agent-aware self-attn + cross-attn + FFN + post-LayerNorms).  The
        # projections are stored pre-fused: self-attn [D,5D] =
        # q_self|q_other|k_self|k_other|v ; cross-attn q [D,2D], kv [D,3D].
        # Matmul weights are bf16 (f32 accumulation); norm/bias params stay f32.
        p = {}
        p['w_in'] = nrm((self.in_dim, D))
        p['b_in'] = jnp.zeros((1, D), jnp.float32)
        p['wqkv_sa'] = nrm((nl, D, 5 * D))
        p['bqkv_sa'] = jnp.zeros((nl, 1, 5 * D), jnp.float32)
        p['wo_sa'] = nrm((nl, D, D))
        p['bo_sa'] = jnp.zeros((nl, 1, D), jnp.float32)
        p['wq_ca'] = nrm((nl, D, 2 * D))
        p['bq_ca'] = jnp.zeros((nl, 1, 2 * D), jnp.float32)
        p['wkv_ca'] = nrm((nl, D, 3 * D))
        p['bkv_ca'] = jnp.zeros((nl, 1, 3 * D), jnp.float32)
        p['wo_ca'] = nrm((nl, D, D))
        p['bo_ca'] = jnp.zeros((nl, 1, D), jnp.float32)
        p['w1'] = nrm((nl, D, F))
        p['b1'] = jnp.zeros((nl, 1, F), jnp.float32)
        p['w2'] = nrm((nl, F, D))
        p['b2'] = jnp.zeros((nl, 1, D), jnp.float32)
        p['ln_g'] = jnp.ones((nl, 3, D), jnp.float32)
        p['ln_b'] = jnp.zeros((nl, 3, D), jnp.float32)
        # out_module: pred_mode == 'point', out_mlp_dim=None -> single Linear,
        # zero-padded to a lane-dense head; the wrapper slices [:, :, :FD].
        p['w_head'] = jnp.zeros((D, self.FD_PAD), jnp.bfloat16).at[
            :, :self.forecast_dim].set(nrm((D, self.forecast_dim)))
        p['b_head'] = jnp.zeros((1, self.FD_PAD), jnp.float32)
        # positional encoding table (PositionalEncoding, concat=False)
        self.t_zero_index = ctx['t_zero_index']
        tw0, tw1 = ctx.get('timestep_window', (0, 20))
        self.t_index_shift = self.t_zero_index - tw0
        pos = np.arange(tw0, tw1, dtype=np.float32)[:, None]
        div = np.exp(np.arange(0, D, 2, dtype=np.float32)
                     * (-np.log(10000.0) / D))
        pe = np.zeros((tw1 - tw0, D), np.float32)
        pe[:, 0::2] = np.sin(pos * div)
        pe[:, 1::2] = np.cos(pos * div)
        p['pe'] = jnp.asarray(pe)
        self.pe_len = pe.shape[0]
        self.params = p
        # learned prior net (f32; runs once per forward)
        if self.learn_prior:
            ndp = 2 * self.nz if self.z_type == 'gaussian' else self.nz
            self.w_pz = nrm((D, ndp), dtype=jnp.float32)
            self.b_pz = jnp.zeros((1, ndp), jnp.float32)
        self._step_cache = {}

    # fixed-shape, jitted per-step decoder (compiled once per (B, L_pad, S))
    def _get_step_fn(self, B, L, S):
        key = (B, L, S)
        fn = self._step_cache.get(key)
        if fn is not None:
            return fn
        call = _build_fused_call(self.n_head, self.n_layer, B, L, S,
                                 self.model_dim, self.ff_dim, self.in_dim,
                                 self.FD_PAD)

        def step(params, dec_input_pad, t_idx, t_row, t_col, ag_row, ag_col,
                 obs_row, context, origins_pad):
            pos = jnp.take(params['pe'], t_idx, axis=0)      # [L, D]
            return call(dec_input_pad, pos, t_row, t_col, ag_row, ag_col,
                        obs_row, context,
                        params['w_in'], params['b_in'],
                        params['wqkv_sa'], params['bqkv_sa'],
                        params['wo_sa'], params['bo_sa'],
                        params['wq_ca'], params['bq_ca'],
                        params['wkv_ca'], params['bkv_ca'],
                        params['wo_ca'], params['bo_ca'],
                        params['w1'], params['b1'],
                        params['w2'], params['b2'],
                        params['ln_g'], params['ln_b'],
                        params['w_head'], params['b_head'], origins_pad)

        fn = jax.jit(step)
        self._step_cache[key] = fn
        return fn

    # ------------------------- decode_traj_ar --------------------------------
    def decode_traj_ar(self, data, mode, context, z, sample_num,
                       need_weights=False):
        B, S, _ = context.shape
        FD = self.forecast_dim

        dec_in = jnp.tile(data['last_obs_positions'], (sample_num, 1, 1))
        dec_in_z = jnp.concatenate([dec_in, z], axis=-1)   # dec_input_type = []

        # ---- host-side schedule: depends only on *inputs*, never on the
        # network outputs -> no device->host sync inside the AR loop ----------
        last_obs = np.asarray(jax.device_get(data['last_obs_timesteps'][0]))
        valid_id = np.asarray(jax.device_get(data['valid_id'][0]))
        obs_ids = np.asarray(jax.device_get(data['obs_identity_sequence'][0]))

        catch_up = last_obs.astype(np.int64).copy()
        n_catch = 0
        while not np.all(catch_up == 0):
            catch_up[catch_up == catch_up.min()] += 1
            n_catch += 1
        total_steps = n_catch + self.future_frames

        starting = last_obs == last_obs.min()
        start_idx = np.where(starting)[0]
        timestep_seq = last_obs[starting].astype(np.int64)
        agent_seq = valid_id[starting].copy()
        pos_agent_idx = list(start_idx)    # per-position index into valid_id
        steps = []
        for _ in range(total_steps):
            L_k = len(timestep_seq)
            t_max = int(timestep_seq.max())
            from_pred_pos = np.where(timestep_seq == t_max)[0]
            from_dec_in_idx = np.where(last_obs == t_max + 1)[0]
            pred_agent_idx = np.array(
                [int(np.argmax(valid_id == a)) for a in agent_seq[from_pred_pos]],
                dtype=np.int64)
            steps.append(dict(L=L_k, timesteps=timestep_seq.copy(),
                              agents=agent_seq.copy(),
                              from_pred_pos=from_pred_pos,
                              pred_agent_idx=pred_agent_idx,
                              from_dec_in_idx=from_dec_in_idx))
            n_new = len(from_pred_pos) + len(from_dec_in_idx)
            timestep_seq = np.concatenate(
                [timestep_seq, np.full(n_new, t_max + 1, dtype=np.int64)])
            agent_seq = np.concatenate(
                [agent_seq, agent_seq[from_pred_pos], valid_id[from_dec_in_idx]])
            pos_agent_idx += list(pred_agent_idx) + list(from_dec_in_idx)

        L_last = steps[-1]['L']
        L_final = len(timestep_seq)
        L_pad = max(8, int(-(-L_final // 8) * 8))      # fixed padded length
        pos_agent_idx = np.asarray(pos_agent_idx, dtype=np.int32)

        # ---- constant (per rollout) device tensors ---------------------------
        obs_row = jnp.asarray(obs_ids, jnp.float32)[None, :]
        origins_pad = jnp.zeros((B, L_pad, self.FD_PAD), jnp.float32)
        if self.pred_type == 'scene_norm' and self.sn_out_type in {'vel', 'norm'}:
            if self.sn_out_type == 'vel':
                raise NotImplementedError("self.sn_out_type == 'vel'")
            orig_idx = np.zeros(L_pad, np.int32)
            orig_idx[:L_final] = pos_agent_idx
            origins_pad = origins_pad.at[:, :, :FD].set(
                jnp.take(dec_in, jnp.asarray(orig_idx), axis=1))

        dec_input_pad = jnp.zeros((B, L_pad, self.in_dim), jnp.float32)
        dec_input_pad = dec_input_pad.at[:, :len(start_idx), :].set(
            jnp.take(dec_in_z, jnp.asarray(start_idx, dtype=jnp.int32), axis=1))

        step_fn = self._get_step_fn(B, L_pad, S)
        dec_src = lax.stop_gradient(dec_in) if self.ar_detach else dec_in

        seq_out_pad = None
        for st in steps:
            L_k = st['L']
            t_full = np.full(L_pad, 1e9, np.float32)
            t_full[:L_k] = st['timesteps']
            a_full = np.full(L_pad, -1e9, np.float32)
            a_full[:L_k] = st['agents']
            t_idx = np.zeros(L_pad, np.int32)
            t_idx[:L_k] = np.clip(st['timesteps'] + self.t_index_shift,
                                  0, self.pe_len - 1)
            t_row = jnp.asarray(t_full)[None, :]
            t_col = jnp.asarray(t_full)[:, None]
            ag_row = jnp.asarray(a_full)[None, :]
            ag_col = jnp.asarray(a_full)[:, None]
            seq_out_pad = step_fn(self.params, dec_input_pad,
                                  jnp.asarray(t_idx), t_row, t_col,
                                  ag_row, ag_col, obs_row, context, origins_pad)
            # append next-timestep rows (tiny gathers with host-known indices)
            seq_src = seq_out_pad[:, :, :FD]
            if self.ar_detach:
                seq_src = lax.stop_gradient(seq_src)
            # NOTE: original torch code indexes the *batch* axis when
            # ar_detach=False (apparent bug); we always gather the agent axis.
            new_rows = []
            if len(st['from_pred_pos']):
                new_rows.append(jnp.concatenate(
                    [jnp.take(seq_src,
                              jnp.asarray(st['from_pred_pos'], jnp.int32),
                              axis=1),
                     jnp.take(z, jnp.asarray(st['pred_agent_idx'], jnp.int32),
                              axis=1)], axis=-1))
            if len(st['from_dec_in_idx']):
                idx = jnp.asarray(st['from_dec_in_idx'], jnp.int32)
                new_rows.append(jnp.concatenate(
                    [jnp.take(dec_src, idx, axis=1),
                     jnp.take(z, idx, axis=1)], axis=-1))
            if new_rows:
                upd = (jnp.concatenate(new_rows, axis=1)
                       if len(new_rows) > 1 else new_rows[0])
                n_new = upd.shape[1]
                dec_input_pad = dec_input_pad.at[:, L_k:L_k + n_new, :].set(upd)

        # ---- final packaging (matches the torch module) ----------------------
        pred_timesteps = timestep_seq[:L_last] + 1
        pred_agents = agent_seq[:L_last]
        past_indices = pred_timesteps <= 0
        seq_out = seq_out_pad[:, :L_last, :FD]
        if self.pred_type == 'scene_norm':
            scene_origs = jnp.tile(data['scene_orig'][None, :],
                                   (sample_num, 1))[:, None, :]
            seq_out = seq_out + scene_origs
        else:
            raise NotImplementedError
        data[f'{mode}_dec_motion'] = seq_out
        data[f'{mode}_dec_agents'] = jnp.tile(
            jnp.asarray(pred_agents, jnp.float32)[None, :], (sample_num, 1))
        data[f'{mode}_dec_past_mask'] = jnp.asarray(past_indices)
        data[f'{mode}_dec_timesteps'] = jnp.asarray(pred_timesteps)
        if need_weights:
            # TODO(synk): per-layer attention-weights dict is not reproduced.
            data['attn_weights'] = None

    # ------------------------------ forward -----------------------------------
    def forward(self, data, mode, sample_num=1, autoregress=True, z=None,
                need_weights=False):
        context = jnp.tile(data['context_enc'], (sample_num, 1, 1))
        prior_key = 'p_z_dist' + ('_infer' if mode == 'infer' else '')
        if self.learn_prior:
            h = jnp.tile(data['agent_context'], (sample_num, 1, 1))
            B, N, D = h.shape
            p_z_params = pallas_linear(h.reshape(B * N, D), self.w_pz,
                                       self.b_pz).reshape(B, N, -1)
            # TODO(synk): Normal/Categorical wrapper classes are external deps;
            # storing raw distribution params instead.
            data[prior_key] = p_z_params
        else:
            data[prior_key] = jnp.zeros(
                (context.shape[0], data['agent_num'], self.nz), jnp.float32)
        if z is None:
            # TODO(synk): sampling from q_z / p_z needs the external dist classes.
            raise ValueError('pass z explicitly for the Pallas implementation')
        if autoregress:
            self.decode_traj_ar(data=data, mode=mode, context=context, z=z,
                                sample_num=sample_num,
                                need_weights=need_weights)


# ----------------------------------- main -------------------------------------

if __name__ == "__main__":
    key = jax.random.PRNGKey(0)
    N_AGENTS, S_CTX = 4, 8
    MODEL_DIM, FF_DIM, N_HEAD, N_LAYER = 32, 64, 4, 2
    FORECAST_DIM, NZ, FUTURE_FRAMES, SAMPLE_NUM = 2, 4, 3, 2

    ctx = {
        'ar_detach': True, 'forecast_dim': FORECAST_DIM,
        'pred_type': 'scene_norm', 'sn_out_type': 'norm',
        'dec_input_type': [], 'future_frames': FUTURE_FRAMES,
        'nz': NZ, 'z_type': 'gaussian', 'tf_model_dim': MODEL_DIM,
        'tf_ff_dim': FF_DIM, 'tf_n_head': N_HEAD, 'tf_dropout': 0.1,
        'future_decoder': {'n_layer': N_LAYER, 'out_mlp_dim': None,
                           'mode': 'point'},
        'learn_prior': True, 'global_map_attention': False,
        'pos_concat': False, 't_zero_index': 7,
    }

    kp, k0, k1, k2, k3, k4 = jax.random.split(key, 6)
    decoder = FutureDecoderPallas(ctx, kp)

    data = {
        'context_enc': jax.random.normal(k0, (1, S_CTX, MODEL_DIM), jnp.float32),
        'agent_context': jax.random.normal(k1, (1, N_AGENTS, MODEL_DIM),
                                           jnp.float32),
        'last_obs_positions': jax.random.normal(k2, (1, N_AGENTS, FORECAST_DIM),
                                                jnp.float32),
        'last_obs_timesteps': jnp.zeros((1, N_AGENTS), jnp.int32),
        'valid_id': jnp.arange(1, N_AGENTS + 1, dtype=jnp.float32)[None, :],
        'obs_identity_sequence': jnp.tile(
            jnp.arange(1, N_AGENTS + 1, dtype=jnp.float32), 2)[None, :],
        'scene_orig': jax.random.normal(k3, (FORECAST_DIM,), jnp.float32),
        'agent_num': N_AGENTS,
    }
    z = jax.random.normal(k4, (SAMPLE_NUM, N_AGENTS, NZ), jnp.float32)

    decoder.forward(data, mode='infer', sample_num=SAMPLE_NUM, z=z)

    motion = jax.block_until_ready(data['infer_dec_motion'])
    assert motion.shape == (SAMPLE_NUM, N_AGENTS * FUTURE_FRAMES, FORECAST_DIM)
    assert bool(jnp.all(jnp.isfinite(motion)))
    print("KERNEL_OK")
</pallas_src>

<mosaic_0001>
module attributes {stable_mosaic.version = 11 : i64} {
  func.func @_linear_kernel(%arg0: i32, %arg1: memref<8x32xf32, #tpu.memory_space<vmem>>, %arg2: memref<32x8xf32, #tpu.memory_space<vmem>>, %arg3: memref<1x8xf32, #tpu.memory_space<vmem>>, %arg4: memref<8x8xf32, #tpu.memory_space<vmem>>) attributes {dimension_semantics = [#tpu.dimension_semantics<arbitrary>], iteration_bounds = array<i64: 1>, scalar_prefetch = 0 : i64, scratch_operands = 0 : i64, tpu.core_type = #tpu.core_type<tc>, window_params = [{pipeline_mode = #tpu.pipeline_mode<synchronous>, transform_indices = @transform_0, window_bounds = array<i64: 8, 32>}, {pipeline_mode = #tpu.pipeline_mode<synchronous>, transform_indices = @transform_1, window_bounds = array<i64: 32, 8>}, {pipeline_mode = #tpu.pipeline_mode<synchronous>, transform_indices = @transform_2, window_bounds = array<i64: 1, 8>}, {pipeline_mode = #tpu.pipeline_mode<synchronous>, transform_indices = @transform_3, window_bounds = array<i64: 8, 8>}]} {
    %c0 = arith.constant 0 : index
    %c0_0 = arith.constant 0 : index
    %0 = vector.load %arg1[%c0, %c0_0] : memref<8x32xf32, #tpu.memory_space<vmem>>, vector<8x32xf32>
    %c0_1 = arith.constant 0 : index
    %c0_2 = arith.constant 0 : index
    %1 = vector.load %arg2[%c0_1, %c0_2] : memref<32x8xf32, #tpu.memory_space<vmem>>, vector<32x8xf32>
    %cst = arith.constant dense<0.000000e+00> : vector<8x8xf32>
    %2 = tpu.matmul %0, %1, %cst {dimension_numbers = #tpu.dot_dimension_numbers<[1], [0], [0], [1], [0, 0, 1, 1], [], []>} : vector<8x32xf32>, vector<32x8xf32>, vector<8x8xf32> -> vector<8x8xf32>
    %c0_3 = arith.constant 0 : index
    %c0_4 = arith.constant 0 : index
    %3 = vector.load %arg3[%c0_3, %c0_4] : memref<1x8xf32, #tpu.memory_space<vmem>>, vector<1x8xf32>
    %4 = vector.broadcast %3 : vector<1x8xf32> to vector<8x8xf32>
    %5 = arith.addf %2, %4 : vector<8x8xf32>
    %c0_5 = arith.constant 0 : index
    %c0_6 = arith.constant 0 : index
    %6 = vector.load %arg4[%c0_5, %c0_6] : memref<8x8xf32, #tpu.memory_space<vmem>>, vector<8x8xf32>
    tpu.vector_store %arg4[%c0_5, %c0_6], %5 {strides = array<i32>} : memref<8x8xf32, #tpu.memory_space<vmem>>, vector<8x8xf32>,
    return
  }
  func.func @transform_0(%arg0: i32) -> (i32, i32) {
    %c0_i32 = arith.constant 0 : i32
    %c0_i32_0 = arith.constant 0 : i32
    %c0_i32_1 = arith.constant 0 : i32
    return %c0_i32, %c0_i32_0 : i32, i32
  }
  func.func @transform_1(%arg0: i32) -> (i32, i32) {
    %c0_i32 = arith.constant 0 : i32
    %c0_i32_0 = arith.constant 0 : i32
    %c0_i32_1 = arith.constant 0 : i32
    return %c0_i32, %c0_i32_0 : i32, i32
  }
  func.func @transform_2(%arg0: i32) -> (i32, i32) {
    %c0_i32 = arith.constant 0 : i32
    %c0_i32_0 = arith.constant 0 : i32
    %c0_i32_1 = arith.constant 0 : i32
    return %c0_i32, %c0_i32_0 : i32, i32
  }
  func.func @transform_3(%arg0: i32) -> (i32, i32) {
    %c0_i32 = arith.constant 0 : i32
    %c0_i32_0 = arith.constant 0 : i32
    %c0_i32_1 = arith.constant 0 : i32
    return %c0_i32, %c0_i32_0 : i32, i32
  }
}

</mosaic_0001>

<llo_original>
// kernel: tpu_custom_call.1
$region0: #{tpu_custom_call.1}
  #allocation0 [shape = 'u32[]', space=smem, size = 0x4, offset = 0x4, fixed_abs, tag = 'smem constant byte address 0x4 - core index']
  #allocation1 [shape = 'u32[144,128]{1,0:T(1,128)}', space=vmem, size = 0x12000, scoped, tag = 'internal scratch']
  %s0 = inlined_call_operand.vmem [shape: f32[8,32], index: 0, kind: input, shape index: {}]
  %s1 = inlined_call_operand.vmem [shape: f32[32,8], index: 1, kind: input, shape index: {}]
  %s2 = inlined_call_operand.vmem [shape: f32[1,8], index: 2, kind: input, shape index: {}]
  %s3 = inlined_call_operand.hbm [shape: f32[8,8], index: 3, kind: output, shape index: {}]
  %s4 = sld [smem:[#allocation0]]
  $region22: #{tpu_custom_call.1} parent=0
    _
  %s6 = ssub.s32 1, %s4
  %s7 = scalar_select 0, %s6, %s4
  $region1: #{tpu_custom_call.1} parent=0
    #allocation2 [shape = 'u8[4096]{0}', space=vmem, size = 0x1000, scoped, tag = 'output window, operand 0, single buffered']
    #allocation3 [shape = 's32[1]{0}', space=sflag, size = 0x4, scoped, tag = 'scoped memory for tpu_custom_call.1']
    %8 = vsyncpa [#allocation3], 0
    // Predicated region
    $region2: #{tpu_custom_call.1} parent=1 // pred_check
      _
    $region3: #{tpu_custom_call.1} parent=1 // pred_check_branch
      %10 = sbr.rel (0) target = $region5
    $region4: #{tpu_custom_call.1} parent=1 // pred_region
      _
    $region5: #{tpu_custom_call.1} parent=1 // pred_fallthru
      _
    // Predicated region
    $region6: #{tpu_custom_call.1} parent=1 // pred_check
      _
    $region7: #{tpu_custom_call.1} parent=1 // pred_check_branch
      %12 = sbr.rel (0) target = $region9
    $region8: #{tpu_custom_call.1} parent=1 // pred_region
      _
    $region9: #{tpu_custom_call.1} parent=1 // pred_fallthru
      _
    // Predicated region
    $region10: #{tpu_custom_call.1} parent=1 // pred_check
      _
    $region11: #{tpu_custom_call.1} parent=1 // pred_check_branch
      %14 = sbr.rel (0) target = $region13
    $region12: #{tpu_custom_call.1} parent=1 // pred_region
      _
    $region13: #{tpu_custom_call.1} parent=1 // pred_fallthru
      _
    %v15 = vld [vmem:[%s0] sm:$0xff]
    %v16 = vld [vmem:[%s1] sm:$0xff]
    %v17 = vld [vmem:[%s1 + $0x8] sm:$0xff]
    %v18 = vld [vmem:[%s1 + $0x10] sm:$0xff]
    %v19 = vld [vmem:[%s1 + $0x18] sm:$0xff]
    %v20 = vld [vmem:[%s2] sm:$0x1]
    %v22 = vlaneseq
    %v23 = vshrl.u32 %v22, 7
    %v24 = vsub.s32 0, %v23
    %v25 = vrot.slane %v20, %v24
    %vm27 = vcmask 261120
    %v29 = vsel %vm27, %v15, 0
    %31 = vmatprep.subr.mxu0 0.0
    %32 = vmatpush1.msra.mxu0 %v16
    %33 = vmatprep.subr.mxu0 0.0
    %34 = vmatpush1.msra.mxu0 %v17
    %35 = vmatprep.subr.mxu0 0.0
    %36 = vmatpush1.msra.mxu0 %v18
    %37 = vmatprep.subr.mxu0 0.0
    %38 = vmatpush1.msra.mxu0 %v19
    %39 = vmatprep.subr.mxu0 0.0
    %40 = vmatpush1.msra.mxu0 0.0
    %41 = vmatprep.subr.mxu0 0.0
    %42 = vmatpush1.msra.mxu0 0.0
    %43 = vmatprep.subr.mxu0 0.0
    %44 = vmatpush1.msra.mxu0 0.0
    %45 = vmatprep.subr.mxu0 0.0
    %46 = vmatpush1.msra.mxu0 0.0
    %47 = vmatprep.subr.mxu0 0.0
    %48 = vmatpush1.msra.mxu0 0.0
    %49 = vmatprep.subr.mxu0 0.0
    %50 = vmatpush1.msra.mxu0 0.0
    %51 = vmatprep.subr.mxu0 0.0
    %52 = vmatpush1.msra.mxu0 0.0
    %53 = vmatprep.subr.mxu0 0.0
    %54 = vmatpush1.msra.mxu0 0.0
    %55 = vmatprep.subr.mxu0 0.0
    %56 = vmatpush1.msra.mxu0 0.0
    %57 = vmatprep.subr.mxu0 0.0
    %58 = vmatpush1.msra.mxu0 0.0
    %59 = vmatprep.subr.mxu0 0.0
    %60 = vmatpush1.msra.mxu0 0.0
    %61 = vmatprep.subr.mxu0 0.0
    %62 = vmatpush1.msra.mxu0 0.0
    %63 = vmatprep.subr.mxu0 0.0
    %64 = vmatpush1.msra.mxu0 0.0
    %65 = vmatprep.subr.mxu0 0.0
    %66 = vmatpush1.msra.mxu0 0.0
    %67 = vmatprep.subr.mxu0 0.0
    %68 = vmatpush1.msra.mxu0 0.0
    %69 = vmatprep.subr.mxu0 0.0
    %70 = vmatpush1.msra.mxu0 0.0
    %71 = vmatprep.subr.mxu0 0.0
    %72 = vmatpush1.msra.mxu0 0.0
    %73 = vmatprep.subr.mxu0 0.0
    %74 = vmatpush1.msra.mxu0 0.0
    %75 = vmatprep.subr.mxu0 0.0
    %76 = vmatpush1.msra.mxu0 0.0
    %77 = vmatprep.subr.mxu0 0.0
    %78 = vmatpush1.msra.mxu0 0.0
    %79 = vmatprep.subr.mxu0 0.0
    %80 = vmatpush1.msra.mxu0 0.0
    %81 = vmatprep.subr.mxu0 0.0
    %82 = vmatpush1.msra.mxu0 0.0
    %83 = vmatprep.subr.mxu0 0.0
    %84 = vmatpush1.msra.mxu0 0.0
    %85 = vmatprep.subr.mxu0 0.0
    %86 = vmatpush1.msra.mxu0 0.0
    %87 = vmatprep.subr.mxu0 0.0
    %88 = vmatpush1.msra.mxu0 0.0
    %89 = vmatprep.subr.mxu0 0.0
    %90 = vmatpush1.msra.mxu0 0.0
    %91 = vmatprep.subr.mxu0 0.0
    %92 = vmatpush1.msra.mxu0 0.0
    %93 = vmatprep.subr.mxu0 0.0
    %94 = vmatpush1.msra.mxu0 0.0
    %95 = vmatprep.mubr.f32.mxu0 0.0
    %96 = vmatmul.mubr.f32.gmra.mrb[0].mxu0 %v29
    %v97 = vpop.f32.mrb[0].mxu0
    %v98 = vadd.f32 %v25, %v97
    %v99 = vpop.f32.mrb[0].mxu0
    %100 = vdwg.mxu0
    %vm101 = vcmask 64512
    %102 = vst.msk [vmem:[#allocation2] sm:$0xff] %vm101, %v98
    // Predicated region
    $region14: #{tpu_custom_call.1} parent=1 // pred_check
      _
    $region15: #{tpu_custom_call.1} parent=1 // pred_check_branch
      %104 = sbr.rel (0) target = $region17
    $region16: #{tpu_custom_call.1} parent=1 // pred_region
      %s106 = ssub.s32 128, 128
      %107 = vsyncadd [#allocation3], %s106
      %s109 = sshll.u32 [#allocation2], 4
      %s110 = int_to_ptr.vmem [resolvable:$true] %s109
      %112 = dma.vmem_to_hbm [thread:$0]  %s110, 128, %s3, [#allocation3]
    $region17: #{tpu_custom_call.1} parent=1 // pred_fallthru
      _
    // Predicated region
    $region18: #{tpu_custom_call.1} parent=1 // pred_check
      _
    $region19: #{tpu_custom_call.1} parent=1 // pred_check_branch
      %114 = sbr.rel (0) target = $region21
    $region20: #{tpu_custom_call.1} parent=1 // pred_region
      %115 = dma.done [#allocation3], 128
    $region21: #{tpu_custom_call.1} parent=1 // pred_fallthru
      _
    %116 = vsyncpa [#allocation3], 1

</llo_original>
